<compile_context>
chip_gen: v7x
topology: tpu7x:2x2x1
jax: 0.10.0
libtpu: 0.0.40
codegen_flags: <defaults>
</compile_context>

<pallas_src>
import math

import jax
import jax.numpy as jnp
from jax.experimental import pallas as pl
from jax.experimental.pallas import tpu as pltpu

IN_FEATURES = 3
HIDDEN = 128
LANE = 128
MAX_TILE = 8192        # lanes per grid step at large batch
MIN_GRID_STEPS = 4     # keep a few parallel steps so v7x's 2 TCs share large batches

_HALF_LOG_2PI = 0.5 * math.log(2.0 * math.pi)


def _policy_kernel(xT_ref, eps_ref, w1_ref, b1_ref, whead_ref, bhead_ref, out_ref):
    # xT_ref   : (3, TB)     x transposed, batch on lanes
    # eps_ref  : (1, TB)     rsample noise
    # w1_ref   : (128, 3)    fc1 weight
    # b1_ref   : (128, 1)    fc1 bias (broadcast add over lanes)
    # whead_ref: (2, 128)    rows = (fc_mu.W, fc_std.W)
    # bhead_ref: (2, 1)      (b_mu, b_std)
    # out_ref  : (2, TB)     row 0 = tanh(a), row 1 = real_log_prob
    xT = xT_ref[...]

    # fc1 + ReLU on the MXU (K=3 contraction), bias added on the VPU.
    hT = jnp.maximum(
        jnp.dot(w1_ref[...], xT, preferred_element_type=jnp.float32) + b1_ref[...],
        0.0)                                                           # (128, TB)

    # Fused mu / pre_std heads (K=128, single MXU pass) + bias broadcast.
    head = (jnp.dot(whead_ref[...], hT, preferred_element_type=jnp.float32)
            + bhead_ref[...])                                          # (2, TB)
    mu = head[0:1, :]                                                  # (1, TB)
    std = jnp.logaddexp(head[1:2, :], 0.0)                             # softplus (stable)

    eps = eps_ref[...]                                                 # (1, TB)
    action = mu + std * eps                                            # rsample

    t = jnp.tanh(action)
    # Normal(mu, std).log_prob(action) with z == eps (exact), minus tanh correction.
    log_prob = -0.5 * (eps * eps) - _HALF_LOG_2PI - jnp.log(std * (1.0 - t * t + 1e-7))

    # One full-block, lane-dense store (no masked partial stores).
    out_ref[...] = jnp.concatenate([t, log_prob], axis=0)


def _round_up(n, m):
    return ((n + m - 1) // m) * m


def _choose_tb(B):
    """Static (trace-time) tile-width selection along the batch/lane axis."""
    b_lane = max(LANE, _round_up(B, LANE))
    if b_lane <= 1024:
        return b_lane                      # small batch: single grid step, launch-bound
    # Large batches: big tiles amortize the ~0.35us per-grid-step overhead, but keep
    # >= MIN_GRID_STEPS steps so v7x's two TensorCores can split the grid.
    tb = _round_up(-(-b_lane // MIN_GRID_STEPS), LANE)
    return max(LANE, min(MAX_TILE, tb))


@jax.jit
def policy_net_forward(x, params, eps):
    """x: (B, 3) f32, eps: (B, 1) f32 standard-normal noise
    -> (tanh(a), real_log_prob), each (B, 1)."""
    w1, b1, whead, bhead = params
    B = x.shape[0]
    TB = _choose_tb(B)
    B_pad = _round_up(B, TB)
    grid = (B_pad // TB,)

    xT = x.T.astype(jnp.float32)                         # (3, B)
    epsT = eps.astype(jnp.float32).reshape(1, B)         # (1, B)
    if B_pad != B:
        pad = B_pad - B
        xT = jnp.pad(xT, ((0, 0), (0, pad)))
        epsT = jnp.pad(epsT, ((0, 0), (0, pad)))

    out = pl.pallas_call(
        _policy_kernel,
        out_shape=jax.ShapeDtypeStruct((2, B_pad), jnp.float32),
        grid=grid,
        in_specs=[
            pl.BlockSpec((IN_FEATURES, TB), lambda i: (0, i)),
            pl.BlockSpec((1, TB), lambda i: (0, i)),
            pl.BlockSpec((HIDDEN, IN_FEATURES), lambda i: (0, 0)),
            pl.BlockSpec((HIDDEN, 1), lambda i: (0, 0)),
            pl.BlockSpec((2, HIDDEN), lambda i: (0, 0)),
            pl.BlockSpec((2, 1), lambda i: (0, 0)),
        ],
        out_specs=pl.BlockSpec((2, TB), lambda i: (0, i)),
        compiler_params=pltpu.CompilerParams(
            dimension_semantics=("parallel",)),
    )(xT, epsT, w1, b1, whead, bhead)

    real_action = out[0, :B][:, None]
    real_log_prob = out[1, :B][:, None]
    return real_action, real_log_prob


def init_params(key):
    """Deterministic init mimicking nn.Linear's U(-1/sqrt(fan_in), 1/sqrt(fan_in)),
    stored in the natural (unpacked) layouts the kernel consumes."""
    k1, k2, k3, k4, k5, k6 = jax.random.split(key, 6)

    lim1 = 1.0 / math.sqrt(IN_FEATURES)
    w1 = jax.random.uniform(k1, (HIDDEN, IN_FEATURES), jnp.float32, -lim1, lim1)
    b1 = jax.random.uniform(k2, (HIDDEN, 1), jnp.float32, -lim1, lim1)

    lim2 = 1.0 / math.sqrt(HIDDEN)
    wmu = jax.random.uniform(k3, (HIDDEN,), jnp.float32, -lim2, lim2)
    bmu = jax.random.uniform(k4, (), jnp.float32, -lim2, lim2)
    wstd = jax.random.uniform(k5, (HIDDEN,), jnp.float32, -lim2, lim2)
    bstd = jax.random.uniform(k6, (), jnp.float32, -lim2, lim2)

    whead = jnp.stack([wmu, wstd], axis=0)                 # (2, 128)
    bhead = jnp.stack([bmu, bstd], axis=0)[:, None]        # (2, 1)
    return (w1, b1, whead, bhead)


def reference_forward(x, params, eps):
    """Pure-JAX reference of the PyTorch forward (same eps)."""
    w1, b1, whead, bhead = params
    h = jax.nn.relu(x @ w1.T + b1[:, 0])
    mu = (h @ whead[0] + bhead[0, 0])[:, None]
    std = jax.nn.softplus(h @ whead[1] + bhead[1, 0])[:, None]
    action = mu + std * eps
    log_prob = (-0.5 * ((action - mu) / std) ** 2
                - jnp.log(std) - 0.5 * jnp.log(2.0 * jnp.pi))
    t = jnp.tanh(action)
    return t, log_prob - jnp.log(1.0 - t * t + 1e-7)


if __name__ == "__main__":
    key = jax.random.PRNGKey(0)
    kp, kx, ke = jax.random.split(key, 3)

    B = 8
    params = init_params(kp)
    x = jax.random.normal(kx, (B, IN_FEATURES), jnp.float32)
    eps = jax.random.normal(ke, (B, 1), jnp.float32)   # rsample noise (host-generated)

    real_action, real_log_prob = policy_net_forward(x, params, eps)
    jax.block_until_ready((real_action, real_log_prob))

    ref_a, ref_lp = reference_forward(x, params, eps)
    assert jnp.allclose(real_action, ref_a, atol=1e-5, rtol=1e-5)
    assert jnp.allclose(real_log_prob, ref_lp, atol=1e-4, rtol=1e-4)

    print("KERNEL_OK")
</pallas_src>

<mosaic_0001>
module attributes {stable_mosaic.version = 11 : i64} {
  func.func @_policy_kernel(%arg0: i32, %arg1: memref<3x128xf32, #tpu.memory_space<vmem>>, %arg2: memref<1x128xf32, #tpu.memory_space<vmem>>, %arg3: memref<128x3xf32, #tpu.memory_space<vmem>>, %arg4: memref<128x1xf32, #tpu.memory_space<vmem>>, %arg5: memref<2x128xf32, #tpu.memory_space<vmem>>, %arg6: memref<2x1xf32, #tpu.memory_space<vmem>>, %arg7: memref<2x128xf32, #tpu.memory_space<vmem>>) attributes {dimension_semantics = [#tpu.dimension_semantics<parallel>], iteration_bounds = array<i64: 1>, scalar_prefetch = 0 : i64, scratch_operands = 0 : i64, tpu.core_type = #tpu.core_type<tc>, window_params = [{transform_indices = @transform_0, window_bounds = array<i64: 3, 128>}, {transform_indices = @transform_1, window_bounds = array<i64: 1, 128>}, {pipeline_mode = #tpu.pipeline_mode<synchronous>, transform_indices = @transform_2, window_bounds = array<i64: 128, 3>}, {pipeline_mode = #tpu.pipeline_mode<synchronous>, transform_indices = @transform_3, window_bounds = array<i64: 128, 1>}, {pipeline_mode = #tpu.pipeline_mode<synchronous>, transform_indices = @transform_4, window_bounds = array<i64: 2, 128>}, {pipeline_mode = #tpu.pipeline_mode<synchronous>, transform_indices = @transform_5, window_bounds = array<i64: 2, 1>}, {transform_indices = @transform_6, window_bounds = array<i64: 2, 128>}]} {
    %c0 = arith.constant 0 : index
    %c0_0 = arith.constant 0 : index
    %0 = vector.load %arg1[%c0, %c0_0] : memref<3x128xf32, #tpu.memory_space<vmem>>, vector<3x128xf32>
    %c0_1 = arith.constant 0 : index
    %c0_2 = arith.constant 0 : index
    %1 = vector.load %arg3[%c0_1, %c0_2] : memref<128x3xf32, #tpu.memory_space<vmem>>, vector<128x3xf32>
    %cst = arith.constant dense<0.000000e+00> : vector<128x128xf32>
    %2 = tpu.matmul %1, %0, %cst {dimension_numbers = #tpu.dot_dimension_numbers<[1], [0], [0], [1], [0, 0, 1, 1], [], []>} : vector<128x3xf32>, vector<3x128xf32>, vector<128x128xf32> -> vector<128x128xf32>
    %c0_3 = arith.constant 0 : index
    %c0_4 = arith.constant 0 : index
    %3 = vector.load %arg4[%c0_3, %c0_4] : memref<128x1xf32, #tpu.memory_space<vmem>>, vector<128x1xf32>
    %4 = vector.broadcast %3 : vector<128x1xf32> to vector<128x128xf32>
    %5 = arith.addf %2, %4 : vector<128x128xf32>
    %cst_5 = arith.constant 0.000000e+00 : f32
    %6 = vector.broadcast %cst_5 : f32 to vector<128x128xf32>
    %7 = arith.maximumf %5, %6 : vector<128x128xf32>
    %c0_6 = arith.constant 0 : index
    %c0_7 = arith.constant 0 : index
    %8 = vector.load %arg5[%c0_6, %c0_7] : memref<2x128xf32, #tpu.memory_space<vmem>>, vector<2x128xf32>
    %cst_8 = arith.constant dense<0.000000e+00> : vector<2x128xf32>
    %9 = tpu.matmul %8, %7, %cst_8 {dimension_numbers = #tpu.dot_dimension_numbers<[1], [0], [0], [1], [0, 0, 1, 1], [], []>} : vector<2x128xf32>, vector<128x128xf32>, vector<2x128xf32> -> vector<2x128xf32>
    %c0_9 = arith.constant 0 : index
    %c0_10 = arith.constant 0 : index
    %10 = vector.load %arg6[%c0_9, %c0_10] : memref<2x1xf32, #tpu.memory_space<vmem>>, vector<2x1xf32>
    %11 = vector.broadcast %10 : vector<2x1xf32> to vector<2x128xf32>
    %12 = arith.addf %9, %11 : vector<2x128xf32>
    %13 = vector.extract_strided_slice %12 {offsets = [0, 0], sizes = [1, 128], strides = [1, 1]} : vector<2x128xf32> to vector<1x128xf32>
    %14 = vector.extract_strided_slice %12 {offsets = [1, 0], sizes = [1, 128], strides = [1, 1]} : vector<2x128xf32> to vector<1x128xf32>
    %cst_11 = arith.constant 0.000000e+00 : f32
    %15 = vector.broadcast %cst_11 : f32 to vector<1x128xf32>
    %16 = arith.maximumf %14, %15 : vector<1x128xf32>
    %17 = vector.broadcast %cst_11 : f32 to vector<1x128xf32>
    %18 = arith.subf %14, %17 : vector<1x128xf32>
    %19 = arith.cmpf one, %18, %18 : vector<1x128xf32>
    %20 = vector.broadcast %cst_11 : f32 to vector<1x128xf32>
    %21 = arith.addf %14, %20 : vector<1x128xf32>
    %22 = math.absf %18 : vector<1x128xf32>
    %cst_12 = arith.constant 0.000000e+00 : f32
    %23 = vector.broadcast %cst_12 : f32 to vector<1x128xf32>
    %24 = arith.subf %23, %22 : vector<1x128xf32>
    %25 = math.exp %24 : vector<1x128xf32>
    %26 = math.log1p %25 : vector<1x128xf32>
    %27 = arith.addf %16, %26 : vector<1x128xf32>
    %28 = arith.select %19, %21, %27 : vector<1x128xi1>, vector<1x128xf32>
    %c0_13 = arith.constant 0 : index
    %c0_14 = arith.constant 0 : index
    %29 = vector.load %arg2[%c0_13, %c0_14] : memref<1x128xf32, #tpu.memory_space<vmem>>, vector<1x128xf32>
    %30 = arith.mulf %28, %29 : vector<1x128xf32>
    %31 = arith.addf %13, %30 : vector<1x128xf32>
    %32 = math.tanh %31 : vector<1x128xf32>
    %33 = arith.mulf %29, %29 : vector<1x128xf32>
    %cst_15 = arith.constant -5.000000e-01 : f32
    %34 = vector.broadcast %cst_15 : f32 to vector<1x128xf32>
    %35 = arith.mulf %34, %33 : vector<1x128xf32>
    %cst_16 = arith.constant 0.918938517 : f32
    %36 = vector.broadcast %cst_16 : f32 to vector<1x128xf32>
    %37 = arith.subf %35, %36 : vector<1x128xf32>
    %38 = arith.mulf %32, %32 : vector<1x128xf32>
    %cst_17 = arith.constant 1.000000e+00 : f32
    %39 = vector.broadcast %cst_17 : f32 to vector<1x128xf32>
    %40 = arith.subf %39, %38 : vector<1x128xf32>
    %cst_18 = arith.constant 1.000000e-07 : f32
    %41 = vector.broadcast %cst_18 : f32 to vector<1x128xf32>
    %42 = arith.addf %40, %41 : vector<1x128xf32>
    %43 = arith.mulf %28, %42 : vector<1x128xf32>
    %44 = math.log %43 : vector<1x128xf32>
    %45 = arith.subf %37, %44 : vector<1x128xf32>
    %46 = tpu.concatenate %32, %45 in 0 : vector<1x128xf32>, vector<1x128xf32> -> vector<2x128xf32>
    %c0_19 = arith.constant 0 : index
    %c0_20 = arith.constant 0 : index
    %47 = vector.load %arg7[%c0_19, %c0_20] : memref<2x128xf32, #tpu.memory_space<vmem>>, vector<2x128xf32>
    tpu.vector_store %arg7[%c0_19, %c0_20], %46 {strides = array<i32>} : memref<2x128xf32, #tpu.memory_space<vmem>>, vector<2x128xf32>,
    return
  }
  func.func @transform_0(%arg0: i32) -> (i32, i32) {
    %c0_i32 = arith.constant 0 : i32
    %c0_i32_0 = arith.constant 0 : i32
    return %c0_i32, %arg0 : i32, i32
  }
  func.func @transform_1(%arg0: i32) -> (i32, i32) {
    %c0_i32 = arith.constant 0 : i32
    %c0_i32_0 = arith.constant 0 : i32
    return %c0_i32, %arg0 : i32, i32
  }
  func.func @transform_2(%arg0: i32) -> (i32, i32) {
    %c0_i32 = arith.constant 0 : i32
    %c0_i32_0 = arith.constant 0 : i32
    %c0_i32_1 = arith.constant 0 : i32
    return %c0_i32, %c0_i32_0 : i32, i32
  }
  func.func @transform_3(%arg0: i32) -> (i32, i32) {
    %c0_i32 = arith.constant 0 : i32
    %c0_i32_0 = arith.constant 0 : i32
    %c0_i32_1 = arith.constant 0 : i32
    return %c0_i32, %c0_i32_0 : i32, i32
  }
  func.func @transform_4(%arg0: i32) -> (i32, i32) {
    %c0_i32 = arith.constant 0 : i32
    %c0_i32_0 = arith.constant 0 : i32
    %c0_i32_1 = arith.constant 0 : i32
    return %c0_i32, %c0_i32_0 : i32, i32
  }
  func.func @transform_5(%arg0: i32) -> (i32, i32) {
    %c0_i32 = arith.constant 0 : i32
    %c0_i32_0 = arith.constant 0 : i32
    %c0_i32_1 = arith.constant 0 : i32
    return %c0_i32, %c0_i32_0 : i32, i32
  }
  func.func @transform_6(%arg0: i32) -> (i32, i32) {
    %c0_i32 = arith.constant 0 : i32
    %c0_i32_0 = arith.constant 0 : i32
    return %c0_i32, %arg0 : i32, i32
  }
}

</mosaic_0001>

<llo_original>
// kernel: policy_net_forward.1
$region0: #{policy_net_forward.1}
  #allocation0 [shape = 'u32[]', space=smem, size = 0x4, offset = 0x4, fixed_abs, tag = 'smem constant byte address 0x4 - core index']
  #allocation1 [shape = 'u32[144,128]{1,0:T(1,128)}', space=vmem, size = 0x12000, scoped, tag = 'internal scratch']
  %s0 = inlined_call_operand.vmem [shape: f32[3,128], index: 0, kind: input, shape index: {}]
  %s1 = inlined_call_operand.vmem [shape: f32[1,128], index: 1, kind: input, shape index: {}]
  %s2 = inlined_call_operand.vmem [shape: f32[128,3], index: 2, kind: input, shape index: {}]
  %s3 = inlined_call_operand.vmem [shape: f32[128,1], index: 3, kind: input, shape index: {}]
  %s4 = inlined_call_operand.vmem [shape: f32[2,128], index: 4, kind: input, shape index: {}]
  %s5 = inlined_call_operand.vmem [shape: f32[2,1], index: 5, kind: input, shape index: {}]
  %s6 = inlined_call_operand.vmem [shape: f32[2,128], index: 6, kind: output, shape index: {}]
  %s7 = sld [smem:[#allocation0]]
  $region34: #{policy_net_forward.1} parent=0
    _
  %s9 = ssub.s32 1, %s7
  %s10 = scalar_select 0, %s9, %s7
  // Predicated region
  $region2: #{policy_net_forward.1} parent=0 // pred_check
    _
  $region3: #{policy_net_forward.1} parent=0 // pred_check_branch
    %12 = sbr.rel (0) target = $region5
  $region4: #{policy_net_forward.1} parent=0 // pred_region
    _
  $region5: #{policy_net_forward.1} parent=0 // pred_fallthru
    _
  // Predicated region
  $region6: #{policy_net_forward.1} parent=0 // pred_check
    _
  $region7: #{policy_net_forward.1} parent=0 // pred_check_branch
    %14 = sbr.rel (0) target = $region9
  $region8: #{policy_net_forward.1} parent=0 // pred_region
    _
  $region9: #{policy_net_forward.1} parent=0 // pred_fallthru
    _
  // Predicated region
  $region10: #{policy_net_forward.1} parent=0 // pred_check
    _
  $region11: #{policy_net_forward.1} parent=0 // pred_check_branch
    %16 = sbr.rel (0) target = $region13
  $region12: #{policy_net_forward.1} parent=0 // pred_region
    _
  $region13: #{policy_net_forward.1} parent=0 // pred_fallthru
    _
  // Predicated region
  $region14: #{policy_net_forward.1} parent=0 // pred_check
    _
  $region15: #{policy_net_forward.1} parent=0 // pred_check_branch
    %18 = sbr.rel (0) target = $region17
  $region16: #{policy_net_forward.1} parent=0 // pred_region
    _
  $region17: #{policy_net_forward.1} parent=0 // pred_fallthru
    _
  // Predicated region
  $region18: #{policy_net_forward.1} parent=0 // pred_check
    _
  $region19: #{policy_net_forward.1} parent=0 // pred_check_branch
    %20 = sbr.rel (0) target = $region21
  $region20: #{policy_net_forward.1} parent=0 // pred_region
    _
  $region21: #{policy_net_forward.1} parent=0 // pred_fallthru
    _
  // Predicated region
  $region22: #{policy_net_forward.1} parent=0 // pred_check
    _
  $region23: #{policy_net_forward.1} parent=0 // pred_check_branch
    %22 = sbr.rel (0) target = $region25
  $region24: #{policy_net_forward.1} parent=0 // pred_region
    _
  $region25: #{policy_net_forward.1} parent=0 // pred_fallthru
    _
  %v23 = vld [vmem:[%s0] sm:$0x7]
  %v24 = vld [vmem:[%s2] sm:$0xff]
  %v25 = vld [vmem:[%s2 + $0x8] sm:$0xff]
  %v26 = vld [vmem:[%s2 + $0x10] sm:$0xff]
  %v27 = vld [vmem:[%s2 + $0x18] sm:$0xff]
  %v28 = vld [vmem:[%s2 + $0x20] sm:$0xff]
  %v29 = vld [vmem:[%s2 + $0x28] sm:$0xff]
  %v30 = vld [vmem:[%s2 + $0x30] sm:$0xff]
  %v31 = vld [vmem:[%s2 + $0x38] sm:$0xff]
  %v32 = vld [vmem:[%s2 + $0x40] sm:$0xff]
  %v33 = vld [vmem:[%s2 + $0x48] sm:$0xff]
  %v34 = vld [vmem:[%s2 + $0x50] sm:$0xff]
  %v35 = vld [vmem:[%s2 + $0x58] sm:$0xff]
  %v36 = vld [vmem:[%s2 + $0x60] sm:$0xff]
  %v37 = vld [vmem:[%s2 + $0x68] sm:$0xff]
  %v38 = vld [vmem:[%s2 + $0x70] sm:$0xff]
  %v39 = vld [vmem:[%s2 + $0x78] sm:$0xff]
  %v40 = vld [vmem:[%s3] sm:$0xff]
  %v41 = vld [vmem:[%s3 + $0x8] sm:$0xff]
  %v42 = vld [vmem:[%s3 + $0x10] sm:$0xff]
  %v43 = vld [vmem:[%s3 + $0x18] sm:$0xff]
  %v44 = vld [vmem:[%s3 + $0x20] sm:$0xff]
  %v45 = vld [vmem:[%s3 + $0x28] sm:$0xff]
  %v46 = vld [vmem:[%s3 + $0x30] sm:$0xff]
  %v47 = vld [vmem:[%s3 + $0x38] sm:$0xff]
  %v48 = vld [vmem:[%s3 + $0x40] sm:$0xff]
  %v49 = vld [vmem:[%s3 + $0x48] sm:$0xff]
  %v50 = vld [vmem:[%s3 + $0x50] sm:$0xff]
  %v51 = vld [vmem:[%s3 + $0x58] sm:$0xff]
  %v52 = vld [vmem:[%s3 + $0x60] sm:$0xff]
  %v53 = vld [vmem:[%s3 + $0x68] sm:$0xff]
  %v54 = vld [vmem:[%s3 + $0x70] sm:$0xff]
  %v55 = vld [vmem:[%s3 + $0x78] sm:$0xff]
  %57 = vset.pattern.permute.xlu0 0
  %58 = vperm.xlu0 %57, %v40
  %v59 = vpop.permute.xlu0 %58
  %62 = vset.pattern.permute.xlu0 0
  %63 = vperm.xlu0 %62, %v41
  %v64 = vpop.permute.xlu0 %63
  %67 = vset.pattern.permute.xlu0 0
  %68 = vperm.xlu0 %67, %v42
  %v69 = vpop.permute.xlu0 %68
  %72 = vset.pattern.permute.xlu0 0
  %73 = vperm.xlu0 %72, %v43
  %v74 = vpop.permute.xlu0 %73
  %77 = vset.pattern.permute.xlu0 0
  %78 = vperm.xlu0 %77, %v44
  %v79 = vpop.permute.xlu0 %78
  %82 = vset.pattern.permute.xlu0 0
  %83 = vperm.xlu0 %82, %v45
  %v84 = vpop.permute.xlu0 %83
  %87 = vset.pattern.permute.xlu0 0
  %88 = vperm.xlu0 %87, %v46
  %v89 = vpop.permute.xlu0 %88
  %92 = vset.pattern.permute.xlu0 0
  %93 = vperm.xlu0 %92, %v47
  %v94 = vpop.permute.xlu0 %93
  %97 = vset.pattern.permute.xlu0 0
  %98 = vperm.xlu0 %97, %v48
  %v99 = vpop.permute.xlu0 %98
  %102 = vset.pattern.permute.xlu0 0
  %103 = vperm.xlu0 %102, %v49
  %v104 = vpop.permute.xlu0 %103
  %107 = vset.pattern.permute.xlu0 0
  %108 = vperm.xlu0 %107, %v50
  %v109 = vpop.permute.xlu0 %108
  %112 = vset.pattern.permute.xlu0 0
  %113 = vperm.xlu0 %112, %v51
  %v114 = vpop.permute.xlu0 %113
  %117 = vset.pattern.permute.xlu0 0
  %118 = vperm.xlu0 %117, %v52
  %v119 = vpop.permute.xlu0 %118
  %122 = vset.pattern.permute.xlu0 0
  %123 = vperm.xlu0 %122, %v53
  %v124 = vpop.permute.xlu0 %123
  %127 = vset.pattern.permute.xlu0 0
  %128 = vperm.xlu0 %127, %v54
  %v129 = vpop.permute.xlu0 %128
  %132 = vset.pattern.permute.xlu0 0
  %133 = vperm.xlu0 %132, %v55
  %v134 = vpop.permute.xlu0 %133
  %vm136 = vcmask 23552
  %v138 = vsel %vm136, %v24, 0
  %v141 = vsel %vm136, %v25, 0
  %v144 = vsel %vm136, %v26, 0
  %v147 = vsel %vm136, %v27, 0
  %v150 = vsel %vm136, %v28, 0
  %v153 = vsel %vm136, %v29, 0
  %v156 = vsel %vm136, %v30, 0
  %v159 = vsel %vm136, %v31, 0
  %v162 = vsel %vm136, %v32, 0
  %v165 = vsel %vm136, %v33, 0
  %v168 = vsel %vm136, %v34, 0
  %v171 = vsel %vm136, %v35, 0
  %v174 = vsel %vm136, %v36, 0
  %v177 = vsel %vm136, %v37, 0
  %v180 = vsel %vm136, %v38, 0
  %v183 = vsel %vm136, %v39, 0
  %vm185 = vcmask 1042432
  %v187 = vsel %vm185, %v23, 0
  %189 = vmatprep.subr.mxu0 0.0
  %190 = vmatpush1.msra.mxu0 %v187
  %191 = vmatprep.subr.mxu0 0.0
  %192 = vmatpush1.msra.mxu0 0.0
  %193 = vmatprep.subr.mxu0 0.0
  %194 = vmatpush1.msra.mxu0 0.0
  %195 = vmatprep.subr.mxu0 0.0
  %196 = vmatpush1.msra.mxu0 0.0
  %197 = vmatprep.subr.mxu0 0.0
  %198 = vmatpush1.msra.mxu0 0.0
  %199 = vmatprep.subr.mxu0 0.0
  %200 = vmatpush1.msra.mxu0 0.0
  %201 = vmatprep.subr.mxu0 0.0
  %202 = vmatpush1.msra.mxu0 0.0
  %203 = vmatprep.subr.mxu0 0.0
  %204 = vmatpush1.msra.mxu0 0.0
  %205 = vmatprep.subr.mxu0 0.0
  %206 = vmatpush1.msra.mxu0 0.0
  %207 = vmatprep.subr.mxu0 0.0
  %208 = vmatpush1.msra.mxu0 0.0
  %209 = vmatprep.subr.mxu0 0.0
  %210 = vmatpush1.msra.mxu0 0.0
  %211 = vmatprep.subr.mxu0 0.0
  %212 = vmatpush1.msra.mxu0 0.0
  %213 = vmatprep.subr.mxu0 0.0
  %214 = vmatpush1.msra.mxu0 0.0
  %215 = vmatprep.subr.mxu0 0.0
  %216 = vmatpush1.msra.mxu0 0.0
  %217 = vmatprep.subr.mxu0 0.0
  %218 = vmatpush1.msra.mxu0 0.0
  %219 = vmatprep.subr.mxu0 0.0
  %220 = vmatpush1.msra.mxu0 0.0
  %221 = vmatprep.subr.mxu0 0.0
  %222 = vmatpush1.msra.mxu0 0.0
  %223 = vmatprep.subr.mxu0 0.0
  %224 = vmatpush1.msra.mxu0 0.0
  %225 = vmatprep.subr.mxu0 0.0
  %226 = vmatpush1.msra.mxu0 0.0
  %227 = vmatprep.subr.mxu0 0.0
  %228 = vmatpush1.msra.mxu0 0.0
  %229 = vmatprep.subr.mxu0 0.0
  %230 = vmatpush1.msra.mxu0 0.0
  %231 = vmatprep.subr.mxu0 0.0
  %232 = vmatpush1.msra.mxu0 0.0
  %233 = vmatprep.subr.mxu0 0.0
  %234 = vmatpush1.msra.mxu0 0.0
  %235 = vmatprep.subr.mxu0 0.0
  %236 = vmatpush1.msra.mxu0 0.0
  %237 = vmatprep.subr.mxu0 0.0
  %238 = vmatpush1.msra.mxu0 0.0
  %239 = vmatprep.subr.mxu0 0.0
  %240 = vmatpush1.msra.mxu0 0.0
  %241 = vmatprep.subr.mxu0 0.0
  %242 = vmatpush1.msra.mxu0 0.0
  %243 = vmatprep.subr.mxu0 0.0
  %244 = vmatpush1.msra.mxu0 0.0
  %245 = vmatprep.subr.mxu0 0.0
  %246 = vmatpush1.msra.mxu0 0.0
  %247 = vmatprep.subr.mxu0 0.0
  %248 = vmatpush1.msra.mxu0 0.0
  %249 = vmatprep.subr.mxu0 0.0
  %250 = vmatpush1.msra.mxu0 0.0
  %251 = vmatprep.subr.mxu0 0.0
  %252 = vmatpush1.msra.mxu0 0.0
  %253 = vmatprep.mubr.f32.mxu0 0.0
  %254 = vmatmul.mubr.f32.gmra.mrb[0].mxu0 %v138
  %v255 = vpop.f32.mrb[0].mxu0
  %v256 = vadd.f32 %v59, %v255
  %v257 = vpop.f32.mrb[0].mxu0
  %258 = vmatprep.mubr.f32.mxu0 0.0
  %259 = vmatmul.mubr.f32.gmra.mrb[0].mxu0 %v141
  %v260 = vpop.f32.mrb[0].mxu0
  %v261 = vadd.f32 %v64, %v260
  %v262 = vpop.f32.mrb[0].mxu0
  %263 = vmatprep.mubr.f32.mxu0 0.0
  %264 = vmatmul.mubr.f32.gmra.mrb[0].mxu0 %v144
  %v265 = vpop.f32.mrb[0].mxu0
  %v266 = vadd.f32 %v69, %v265
  %v267 = vpop.f32.mrb[0].mxu0
  %268 = vmatprep.mubr.f32.mxu0 0.0
  %269 = vmatmul.mubr.f32.gmra.mrb[0].mxu0 %v147
  %v270 = vpop.f32.mrb[0].mxu0
  %v271 = vadd.f32 %v74, %v270
  %v272 = vpop.f32.mrb[0].mxu0
  %273 = vmatprep.mubr.f32.mxu0 0.0
  %274 = vmatmul.mubr.f32.gmra.mrb[0].mxu0 %v150
  %v275 = vpop.f32.mrb[0].mxu0
  %v276 = vadd.f32 %v79, %v275
  %v277 = vpop.f32.mrb[0].mxu0
  %278 = vmatprep.mubr.f32.mxu0 0.0
  %279 = vmatmul.mubr.f32.gmra.mrb[0].mxu0 %v153
  %v280 = vpop.f32.mrb[0].mxu0
  %v281 = vadd.f32 %v84, %v280
  %v282 = vpop.f32.mrb[0].mxu0
  %283 = vmatprep.mubr.f32.mxu0 0.0
  %284 = vmatmul.mubr.f32.gmra.mrb[0].mxu0 %v156
  %v285 = vpop.f32.mrb[0].mxu0
  %v286 = vadd.f32 %v89, %v285
  %v287 = vpop.f32.mrb[0].mxu0
  %288 = vmatprep.mubr.f32.mxu0 0.0
  %289 = vmatmul.mubr.f32.gmra.mrb[0].mxu0 %v159
  %v290 = vpop.f32.mrb[0].mxu0
  %v291 = vadd.f32 %v94, %v290
  %v292 = vpop.f32.mrb[0].mxu0
  %293 = vmatprep.mubr.f32.mxu0 0.0
  %294 = vmatmul.mubr.f32.gmra.mrb[0].mxu0 %v162
  %v295 = vpop.f32.mrb[0].mxu0
  %v296 = vadd.f32 %v99, %v295
  %v297 = vpop.f32.mrb[0].mxu0
  %298 = vmatprep.mubr.f32.mxu0 0.0
  %299 = vmatmul.mubr.f32.gmra.mrb[0].mxu0 %v165
  %v300 = vpop.f32.mrb[0].mxu0
  %v301 = vadd.f32 %v104, %v300
  %v302 = vpop.f32.mrb[0].mxu0
  %303 = vmatprep.mubr.f32.mxu0 0.0
  %304 = vmatmul.mubr.f32.gmra.mrb[0].mxu0 %v168
  %v305 = vpop.f32.mrb[0].mxu0
  %v306 = vadd.f32 %v109, %v305
  %v307 = vpop.f32.mrb[0].mxu0
  %308 = vmatprep.mubr.f32.mxu0 0.0
  %309 = vmatmul.mubr.f32.gmra.mrb[0].mxu0 %v171
  %v310 = vpop.f32.mrb[0].mxu0
  %v311 = vadd.f32 %v114, %v310
  %v312 = vpop.f32.mrb[0].mxu0
  %313 = vmatprep.mubr.f32.mxu0 0.0
  %314 = vmatmul.mubr.f32.gmra.mrb[0].mxu0 %v174
  %v315 = vpop.f32.mrb[0].mxu0
  %v316 = vadd.f32 %v119, %v315
  %v317 = vpop.f32.mrb[0].mxu0
  %318 = vmatprep.mubr.f32.mxu0 0.0
  %319 = vmatmul.mubr.f32.gmra.mrb[0].mxu0 %v177
  %v320 = vpop.f32.mrb[0].mxu0
  %v321 = vadd.f32 %v124, %v320
  %v322 = vpop.f32.mrb[0].mxu0
  %323 = vmatprep.mubr.f32.mxu0 0.0
  %324 = vmatmul.mubr.f32.gmra.mrb[0].mxu0 %v180
  %v325 = vpop.f32.mrb[0].mxu0
  %v326 = vadd.f32 %v129, %v325
  %v327 = vpop.f32.mrb[0].mxu0
  %328 = vmatprep.mubr.f32.mxu0 0.0
  %329 = vmatmul.mubr.f32.gmra.mrb[0].mxu0 %v183
  %v330 = vpop.f32.mrb[0].mxu0
  %v331 = vadd.f32 %v134, %v330
  %v332 = vpop.f32.mrb[0].mxu0
  %333 = vdwg.mxu0
  %v334 = vmax.f32 %v256, 0.0
  %v335 = vmax.f32 %v261, 0.0
  %v336 = vmax.f32 %v266, 0.0
  %v337 = vmax.f32 %v271, 0.0
  %v338 = vmax.f32 %v276, 0.0
  %v339 = vmax.f32 %v281, 0.0
  %v340 = vmax.f32 %v286, 0.0
  %v341 = vmax.f32 %v291, 0.0
  %v342 = vmax.f32 %v296, 0.0
  %v343 = vmax.f32 %v301, 0.0
  %v344 = vmax.f32 %v306, 0.0
  %v345 = vmax.f32 %v311, 0.0
  %v346 = vmax.f32 %v316, 0.0
  %v347 = vmax.f32 %v321, 0.0
  %v348 = vmax.f32 %v326, 0.0
  %v349 = vmax.f32 %v331, 0.0
  %v350 = vld [vmem:[%s4] sm:$0x3]
  %v351 = vld [vmem:[%s5] sm:$0x3]
  %353 = vset.pattern.permute.xlu0 0
  %354 = vperm.xlu0 %353, %v351
  %v355 = vpop.permute.xlu0 %354
  %357 = vmatprep.subr.mxu0 0.0
  %358 = vmatpush1.msra.mxu0 %v334
  %359 = vmatprep.subr.mxu0 0.0
  %360 = vmatpush1.msra.mxu0 %v335
  %361 = vmatprep.subr.mxu0 0.0
  %362 = vmatpush1.msra.mxu0 %v336
  %363 = vmatprep.subr.mxu0 0.0
  %364 = vmatpush1.msra.mxu0 %v337
  %365 = vmatprep.subr.mxu0 0.0
  %366 = vmatpush1.msra.mxu0 %v338
  %367 = vmatprep.subr.mxu0 0.0
  %368 = vmatpush1.msra.mxu0 %v339
  %369 = vmatprep.subr.mxu0 0.0
  %370 = vmatpush1.msra.mxu0 %v340
  %371 = vmatprep.subr.mxu0 0.0
  %372 = vmatpush1.msra.mxu0 %v341
  %373 = vmatprep.subr.mxu0 0.0
  %374 = vmatpush1.msra.mxu0 %v342
  %375 = vmatprep.subr.mxu0 0.0
  %376 = vmatpush1.msra.mxu0 %v343
  %377 = vmatprep.subr.mxu0 0.0
  %378 = vmatpush1.msra.mxu0 %v344
  %379 = vmatprep.subr.mxu0 0.0
  %380 = vmatpush1.msra.mxu0 %v345
  %381 = vmatprep.subr.mxu0 0.0
  %382 = vmatpush1.msra.mxu0 %v346
  %383 = vmatprep.subr.mxu0 0.0
  %384 = vmatpush1.msra.mxu0 %v347
  %385 = vmatprep.subr.mxu0 0.0
  %386 = vmatpush1.msra.mxu0 %v348
  %387 = vmatprep.subr.mxu0 0.0
  %388 = vmatpush1.msra.mxu0 %v349
  %389 = vmatprep.subr.mxu0 0.0
  %390 = vmatpush1.msra.mxu0 0.0
  %391 = vmatprep.subr.mxu0 0.0
  %392 = vmatpush1.msra.mxu0 0.0
  %393 = vmatprep.subr.mxu0 0.0
  %394 = vmatpush1.msra.mxu0 0.0
  %395 = vmatprep.subr.mxu0 0.0
  %396 = vmatpush1.msra.mxu0 0.0
  %397 = vmatprep.subr.mxu0 0.0
  %398 = vmatpush1.msra.mxu0 0.0
  %399 = vmatprep.subr.mxu0 0.0
  %400 = vmatpush1.msra.mxu0 0.0
  %401 = vmatprep.subr.mxu0 0.0
  %402 = vmatpush1.msra.mxu0 0.0
  %403 = vmatprep.subr.mxu0 0.0
  %404 = vmatpush1.msra.mxu0 0.0
  %405 = vmatprep.subr.mxu0 0.0
  %406 = vmatpush1.msra.mxu0 0.0
  %407 = vmatprep.subr.mxu0 0.0
  %408 = vmatpush1.msra.mxu0 0.0
  %409 = vmatprep.subr.mxu0 0.0
  %410 = vmatpush1.msra.mxu0 0.0
  %411 = vmatprep.subr.mxu0 0.0
  %412 = vmatpush1.msra.mxu0 0.0
  %413 = vmatprep.subr.mxu0 0.0
  %414 = vmatpush1.msra.mxu0 0.0
  %415 = vmatprep.subr.mxu0 0.0
  %416 = vmatpush1.msra.mxu0 0.0
  %417 = vmatprep.subr.mxu0 0.0
  %418 = vmatpush1.msra.mxu0 0.0
  %419 = vmatprep.subr.mxu0 0.0
  %420 = vmatpush1.msra.mxu0 0.0
  %421 = vmatprep.mubr.f32.mxu0 0.0
  %422 = vmatmul.mubr.f32.gmra.mrb[0].mxu0 %v350
  %v423 = vpop.f32.mrb[0].mxu0
  %v424 = vadd.f32 %v355, %v423
  %v425 = vpop.f32.mrb[0].mxu0
  %426 = vdwg.mxu0
  %v427 = vmax.f32 %v424, 0.0
  %vm428 = vcmp.ne.f32.partialorder %v424, %v424
  %v429 = vadd.f32 %v424, 0.0
  %v430 = vand.u32 2147483647, %v424
  %v431 = vsub.f32 0.0, %v430
  %v432 = vmul.f32 %v431, 1.442695
  %v433 = vpow.pop %v432
  %v434 = vadd.f32 %v433, 1.0
  %v435 = vlog2.pop %v434
  %v436 = vmul.f32 %v435, 0.6931472
  %v437 = vmul.f32 -0.5, %v433
  %v438 = vadd.f32 %v437, 1.0
  %v439 = vmul.f32 %v438, %v433
  %v440 = vand.u32 2147483647, %v433
  %vm441 = vcmp.lt.f32.partialorder %v440, 0.0004427343
  %v442 = vsel %vm441, %v439, %v436
  %v443 = vadd.f32 %v427, %v442
  %v444 = vsel %vm428, %v429, %v443
  %v445 = vld [vmem:[%s1] sm:$0x1]
  %v447 = vlaneseq
  %v448 = vshrl.u32 %v447, 7
  %v449 = vsub.s32 0, %v448
  %v450 = vrot.slane %v445, %v449
  %v452 = vmul.f32 %v444, %v450
  %v454 = vrot.slane %v452, 1
  %v456 = vadd.f32 %v424, %v454
  %v457 = vtanh.pop %v456
  %v458 = vmul.f32 %v445, %v445
  %v459 = vmul.f32 %v458, -0.5
  %v460 = vsub.f32 %v459, 0.9189385
  %v461 = vmul.f32 %v457, %v457
  %v462 = vsub.f32 1.0, %v461
  %v463 = vadd.f32 %v462, 1e-07
  %v465 = vrot.slane %v463, 7
  %v467 = vmul.f32 %v444, %v465
  %v468 = vlog2.pop %v467
  %v469 = vmul.f32 %v468, 0.6931472
  %v472 = vunpack.c.l.s4 1966171168
  %v473 = vunpack.c.0.s8 %v472
  %v474 = vlaneseq
  %v475 = vshrl.u32 %v474, 7
  %v476 = vsub.s32 %v473, %v475
  %v477 = vrot.slane %v469, %v476
  %v478 = vcombine.high %v477, %v477
  %v480 = vunpack.c.l.s4 1966171168
  %v481 = vunpack.c.0.s8 %v480
  %v482 = vlaneseq
  %v483 = vshrl.u32 %v482, 7
  %v484 = vsub.s32 %v481, %v483
  %v485 = vrot.slane %v478, %v484
  %v487 = vsub.f32 %v460, %v485
  %v489 = vlaneseq
  %v490 = vshrl.u32 %v489, 7
  %v491 = vsub.s32 0, %v490
  %v492 = vrot.slane %v487, %v491
  %vm494 = vcmask 1040384
  %v495 = vsel %vm494, %v457, %v492
  %496 = vst [vmem:[%s6] sm:$0x3] %v495
  // Predicated region
  $region26: #{policy_net_forward.1} parent=0 // pred_check
    _
  $region27: #{policy_net_forward.1} parent=0 // pred_check_branch
    %498 = sbr.rel (0) target = $region29
  $region28: #{policy_net_forward.1} parent=0 // pred_region
    _
  $region29: #{policy_net_forward.1} parent=0 // pred_fallthru
    _
  // Predicated region
  $region30: #{policy_net_forward.1} parent=0 // pred_check
    _
  $region31: #{policy_net_forward.1} parent=0 // pred_check_branch
    %500 = sbr.rel (0) target = $region33
  $region32: #{policy_net_forward.1} parent=0 // pred_region
    _
  $region33: #{policy_net_forward.1} parent=0 // pred_fallthru
    _

</llo_original>
